<compile_context>
chip_gen: v7x
topology: tpu7x:2x2x1
jax: 0.10.0
libtpu: 0.0.40
codegen_flags: <defaults>
</compile_context>

<pallas_src>
import functools

import jax
import jax.numpy as jnp
from jax.experimental import pallas as pl
from jax.experimental.pallas import tpu as pltpu

_LANE = 128
_SUBLANE = 8
_NEG_BIG = -1e30  # "minus infinity" bias for padded class columns (bf16/f32 safe)


def _round_up(n, m):
    return ((n + m - 1) // m) * m


# ---------------------------------------------------------------------------
# Kernel body: one batch tile -> h = relu(x@w1+b1); logits = h@w2+b2;
# log_softmax over the (lane-padded) class dim; store only the real C columns.
# ---------------------------------------------------------------------------
def _speaker_id_kernel(n_classes, x_ref, w1_ref, b1_ref, w2_ref, b2_ref, out_ref):
    # x_ref:  (TB, D_in)           native dtype (f32 or bf16)
    # w1_ref: (D_in, Hp), b1_ref: (1, Hp)
    # w2_ref: (Hp, Cp),   b2_ref: (1, Cp)   (padded class cols carry -1e30 bias)
    # out_ref: (TB, C)              C == full output dim (may be < 128)
    x = x_ref[...]

    # Linear 1 (+ bias) + ReLU.  Native-dtype MXU operands, f32 accumulation.
    h = jnp.dot(x, w1_ref[...], preferred_element_type=jnp.float32)
    h = jnp.maximum(h + b1_ref[...].astype(jnp.float32), 0.0)

    # Linear 2: feed the MXU in the weight dtype (bf16 path stays bf16).
    logits = jnp.dot(h.astype(w2_ref.dtype), w2_ref[...],
                     preferred_element_type=jnp.float32)
    logits = logits + b2_ref[...].astype(jnp.float32)

    # Numerically stable log_softmax in f32.  Padded columns sit at ~-1e30, so
    # exp(shifted) == 0 there and only real classes enter the normalization.
    m = jnp.max(logits, axis=-1, keepdims=True)
    shifted = logits - m
    lse = jnp.log(jnp.sum(jnp.exp(shifted), axis=-1, keepdims=True))
    log_probs = shifted - lse

    # Store only real classes: avoids a padded (TB, Cp) HBM write + post-slice
    # copy.  The masked narrow store is hidden under the DMA-bound regime.
    out_ref[...] = log_probs[:, :n_classes].astype(out_ref.dtype)


# ---------------------------------------------------------------------------
# Generation-aware sizing helpers.
# ---------------------------------------------------------------------------
@functools.lru_cache(maxsize=1)
def _tpu_generation():
    """Returns (vmem_capacity_bytes, tensorcores_per_chip) with safe fallbacks."""
    vmem_bytes = 64 << 20   # conservative default (v7x per-TC VMEM)
    n_tc = 2                # conservative default: assume 2 TCs (v7x)
    try:
        kind = jax.devices()[0].device_kind.lower()
    except Exception:
        kind = ""
    if any(t in kind for t in ("v2", "v3", "v4", "v5", "v6")):
        vmem_bytes = 128 << 20
        n_tc = 1
    try:  # refine with the real capacity if the query is available
        vmem_bytes = int(pltpu.get_tpu_info().vmem_capacity_bytes)
    except Exception:
        pass
    return vmem_bytes, n_tc


def _choose_tile_b(batch, d_in, c_out, h_pad, c_pad, x_itemsize, out_itemsize,
                   weight_bytes, budget_bytes, n_tc):
    """Largest sublane-aligned batch tile (<=1024 rows) fitting the VMEM budget."""
    # Per-row cost: double-buffered streamed x row + out row, plus the f32
    # hidden/logit intermediates that live in VMEM/vregs during compute.
    row_bytes = (2 * (d_in * x_itemsize + c_out * out_itemsize)
                 + (h_pad + 2 * c_pad) * 4)
    b8 = _round_up(batch, _SUBLANE)
    tile = min(b8, 1024)
    avail = budget_bytes - weight_bytes          # weights are single-buffered
    if avail <= 0:
        avail = budget_bytes // 4
    while tile > _SUBLANE and tile * row_bytes > avail:
        tile = max(_SUBLANE, _round_up(tile // 2, _SUBLANE))
    # Only on multi-TC chips (v7x): prefer an even number of >=2 grid steps so
    # the "parallel" batch axis shards evenly across both TensorCores.
    if n_tc >= 2 and b8 > _SUBLANE:
        steps = pl.cdiv(b8, tile)
        if steps % 2 == 1:
            tile = max(_SUBLANE, _round_up(pl.cdiv(b8, steps + 1), _SUBLANE))
    return tile


# ---------------------------------------------------------------------------
# Init-time parameter preparation (pad once, not per forward call).
# ---------------------------------------------------------------------------
def prepare_speaker_id_params(w1, b1, w2, b2):
    """Pad weights/biases to lane width once. Weights stored as [in, out]."""
    d_in, h = w1.shape
    c = w2.shape[1]
    assert w2.shape[0] == h and b1.shape[-1] == h and b2.shape[-1] == c
    h_pad = _round_up(h, _LANE)
    c_pad = _round_up(c, _LANE)
    w1p = jnp.pad(w1, ((0, 0), (0, h_pad - h)))
    b1p = jnp.pad(jnp.reshape(b1, (1, h)), ((0, 0), (0, h_pad - h)))
    # Zero-padded hidden units are killed by zero rows of w2; padded class
    # columns get a -1e30 bias so they vanish from the softmax.
    w2p = jnp.pad(w2, ((0, h_pad - h), (0, c_pad - c)))
    b2p = jnp.pad(jnp.reshape(b2, (1, c)), ((0, 0), (0, c_pad - c)),
                  constant_values=_NEG_BIG)
    return {"w1": w1p, "b1": b1p, "w2": w2p, "b2": b2p,
            "d_in": d_in, "hidden": h, "n_classes": c}


# ---------------------------------------------------------------------------
# Forward pass.
# ---------------------------------------------------------------------------
def speaker_id_classifier_forward(x, params, *, tile_b=None):
    """x: [..., D_in]; params from prepare_speaker_id_params. Returns [..., C]."""
    lead_shape = x.shape[:-1]
    d_in = x.shape[-1]
    assert d_in == params["d_in"]
    c = params["n_classes"]
    w1p, b1p, w2p, b2p = params["w1"], params["b1"], params["w2"], params["b2"]
    h_pad = w1p.shape[1]
    c_pad = w2p.shape[1]

    x2 = x.reshape(-1, d_in)
    b = x2.shape[0]

    x_bytes = jnp.dtype(x2.dtype).itemsize
    p_bytes = jnp.dtype(w1p.dtype).itemsize
    weight_bytes = (d_in * h_pad + h_pad + h_pad * c_pad + c_pad) * p_bytes

    vmem_cap, n_tc = _tpu_generation()
    budget = int(0.7 * vmem_cap)            # ~89 MiB on v5e/v6e, ~45 MiB on v7x

    if tile_b is None:
        tile_b = _choose_tile_b(b, d_in, c, h_pad, c_pad, x_bytes, x_bytes,
                                weight_bytes, budget, n_tc)
    assert tile_b % _SUBLANE == 0, "tile_b must be a multiple of 8 (sublanes)"

    # Ragged last tile: OOB rows read garbage (rows are independent) and their
    # output rows are dropped by the clipped writeback -- no jnp.pad of x.
    grid = (pl.cdiv(b, tile_b),)

    # VMEM limit: 1.5x the estimate (double-buffered x/out, single-buffered
    # weights, f32 intermediates), capped below physical VMEM for Mosaic scratch.
    est_vmem = (2 * tile_b * (d_in + c) * x_bytes
                + tile_b * (h_pad + 2 * c_pad) * 4
                + weight_bytes)
    cap = min(int(0.75 * vmem_cap), 100 << 20)
    vmem_limit = int(min(cap, max(16 << 20, int(1.5 * est_vmem))))

    cost = pl.CostEstimate(
        flops=2 * b * (d_in * h_pad + h_pad * c_pad),
        transcendentals=b * (c_pad + 1),        # exp per class + log per row
        bytes_accessed=b * (d_in + c) * x_bytes + weight_bytes,
    )

    def _build_specs(use_pipeline_mode):
        w_kw, x_kw = {}, {}
        if use_pipeline_mode:
            # Grid-invariant weights: no pointless double buffer.
            w_kw = dict(pipeline_mode=pl.Buffered(1))
            # Multi-TC chip + small tiles: deepen x pipelining to hide DMA.
            if n_tc >= 2 and tile_b <= 64:
                x_kw = dict(pipeline_mode=pl.Buffered(3))
        in_specs = [
            pl.BlockSpec((tile_b, d_in), lambda i: (i, 0), **x_kw),   # x tile
            pl.BlockSpec((d_in, h_pad), lambda i: (0, 0), **w_kw),    # w1
            pl.BlockSpec((1, h_pad), lambda i: (0, 0), **w_kw),       # b1
            pl.BlockSpec((h_pad, c_pad), lambda i: (0, 0), **w_kw),   # w2
            pl.BlockSpec((1, c_pad), lambda i: (0, 0), **w_kw),       # b2
        ]
        out_specs = pl.BlockSpec((tile_b, c), lambda i: (i, 0))
        return in_specs, out_specs

    def _run(use_pipeline_mode):
        in_specs, out_specs = _build_specs(use_pipeline_mode)
        return pl.pallas_call(
            functools.partial(_speaker_id_kernel, c),
            out_shape=jax.ShapeDtypeStruct((b, c), x2.dtype),
            grid_spec=pltpu.PrefetchScalarGridSpec(
                num_scalar_prefetch=0,
                grid=grid,
                in_specs=in_specs,
                out_specs=out_specs,
            ),
            compiler_params=pltpu.CompilerParams(
                dimension_semantics=("parallel",),
                vmem_limit_bytes=vmem_limit,
            ),
            cost_estimate=cost,
        )(x2, w1p, b1p, w2p, b2p)

    try:
        out = jax.block_until_ready(_run(True))
    except Exception:
        # Fallback: default double-buffered specs if pipeline_mode is rejected.
        out = _run(False)

    # TODO(synk): for very large n_classes (w2 / logits tile no longer VMEM
    # resident), add an "arbitrary" grid axis over class blocks with an online
    # logsumexp (running max/sum in VMEM scratch) instead of resident w2.
    return out.reshape(lead_shape + (c,))


def _reference_forward(x, w1, b1, w2, b2):
    h = jnp.maximum(x @ w1 + b1, 0.0)
    logits = h @ w2 + b2
    return jax.nn.log_softmax(logits, axis=-1)


if __name__ == "__main__":
    # Small shapes consistent with the module: batch=8, input_dim=32,
    # hidden_dim=64, n_classes=16.
    B, D_IN, HID, N_CLASSES = 8, 32, 64, 16

    key = jax.random.PRNGKey(0)
    kx, kw1, kb1, kw2, kb2 = jax.random.split(key, 5)

    x = jax.random.normal(kx, (B, D_IN), dtype=jnp.float32)
    w1 = jax.random.normal(kw1, (D_IN, HID), dtype=jnp.float32) * (1.0 / D_IN ** 0.5)
    b1 = jax.random.normal(kb1, (HID,), dtype=jnp.float32) * 0.01
    w2 = jax.random.normal(kw2, (HID, N_CLASSES), dtype=jnp.float32) * (1.0 / HID ** 0.5)
    b2 = jax.random.normal(kb2, (N_CLASSES,), dtype=jnp.float32) * 0.01

    # Weights padded ONCE (init-time), reused across forward calls.
    params = prepare_speaker_id_params(w1, b1, w2, b2)

    # f32 path (exact vs reference).
    log_probs = jax.block_until_ready(speaker_id_classifier_forward(x, params))
    ref = _reference_forward(x, w1, b1, w2, b2)
    assert log_probs.shape == (B, N_CLASSES)
    assert jnp.allclose(log_probs, ref, atol=1e-5, rtol=1e-5), "f32 mismatch vs reference"

    # Ragged-batch path: 15 rows with tile_b=8 (no wrapper-side x padding).
    xr = jax.random.normal(kw1, (3, 5, D_IN), dtype=jnp.float32)
    lp_r = jax.block_until_ready(
        speaker_id_classifier_forward(xr, params, tile_b=8))
    ref_r = _reference_forward(xr, w1, b1, w2, b2)
    assert lp_r.shape == (3, 5, N_CLASSES)
    assert jnp.allclose(lp_r, ref_r, atol=1e-5, rtol=1e-5), "ragged mismatch vs reference"

    # bf16 path: MXU fed bf16 operands, f32 accumulate, f32 softmax epilogue.
    to_bf16 = lambda a: a.astype(jnp.bfloat16)
    params_bf16 = prepare_speaker_id_params(to_bf16(w1), to_bf16(b1),
                                            to_bf16(w2), to_bf16(b2))
    lp_bf16 = jax.block_until_ready(
        speaker_id_classifier_forward(to_bf16(x), params_bf16))
    assert lp_bf16.shape == (B, N_CLASSES)
    assert jnp.allclose(lp_bf16.astype(jnp.float32), ref, atol=1e-1, rtol=1e-1), \
        "bf16 mismatch vs reference"

    print("KERNEL_OK")
</pallas_src>

<mosaic_0001>
module attributes {stable_mosaic.version = 11 : i64} {
  func.func @_speaker_id_kernel(%arg0: i32, %arg1: memref<8x32xf32, #tpu.memory_space<vmem>>, %arg2: memref<32x128xf32, #tpu.memory_space<vmem>>, %arg3: memref<1x128xf32, #tpu.memory_space<vmem>>, %arg4: memref<128x128xf32, #tpu.memory_space<vmem>>, %arg5: memref<1x128xf32, #tpu.memory_space<vmem>>, %arg6: memref<8x16xf32, #tpu.memory_space<vmem>>) attributes {dimension_semantics = [#tpu.dimension_semantics<parallel>], iteration_bounds = array<i64: 1>, scalar_prefetch = 0 : i64, scratch_operands = 0 : i64, tpu.core_type = #tpu.core_type<tc>, window_params = [{transform_indices = @transform_0, window_bounds = array<i64: 8, 32>}, {pipeline_mode = #tpu.pipeline_mode<synchronous>, transform_indices = @transform_1, window_bounds = array<i64: 32, 128>}, {pipeline_mode = #tpu.pipeline_mode<synchronous>, transform_indices = @transform_2, window_bounds = array<i64: 1, 128>}, {pipeline_mode = #tpu.pipeline_mode<synchronous>, transform_indices = @transform_3, window_bounds = array<i64: 128, 128>}, {pipeline_mode = #tpu.pipeline_mode<synchronous>, transform_indices = @transform_4, window_bounds = array<i64: 1, 128>}, {transform_indices = @transform_5, window_bounds = array<i64: 8, 16>}]} {
    %c0 = arith.constant 0 : index
    %c0_0 = arith.constant 0 : index
    %0 = vector.load %arg1[%c0, %c0_0] : memref<8x32xf32, #tpu.memory_space<vmem>>, vector<8x32xf32>
    %c0_1 = arith.constant 0 : index
    %c0_2 = arith.constant 0 : index
    %1 = vector.load %arg2[%c0_1, %c0_2] : memref<32x128xf32, #tpu.memory_space<vmem>>, vector<32x128xf32>
    %cst = arith.constant dense<0.000000e+00> : vector<8x128xf32>
    %2 = tpu.matmul %0, %1, %cst {dimension_numbers = #tpu.dot_dimension_numbers<[1], [0], [0], [1], [0, 0, 1, 1], [], []>} : vector<8x32xf32>, vector<32x128xf32>, vector<8x128xf32> -> vector<8x128xf32>
    %c0_3 = arith.constant 0 : index
    %c0_4 = arith.constant 0 : index
    %3 = vector.load %arg3[%c0_3, %c0_4] : memref<1x128xf32, #tpu.memory_space<vmem>>, vector<1x128xf32>
    %4 = vector.broadcast %3 : vector<1x128xf32> to vector<8x128xf32>
    %5 = arith.addf %2, %4 : vector<8x128xf32>
    %cst_5 = arith.constant 0.000000e+00 : f32
    %6 = vector.broadcast %cst_5 : f32 to vector<8x128xf32>
    %7 = arith.maximumf %5, %6 : vector<8x128xf32>
    %c0_6 = arith.constant 0 : index
    %c0_7 = arith.constant 0 : index
    %8 = vector.load %arg4[%c0_6, %c0_7] : memref<128x128xf32, #tpu.memory_space<vmem>>, vector<128x128xf32>
    %cst_8 = arith.constant dense<0.000000e+00> : vector<8x128xf32>
    %9 = tpu.matmul %7, %8, %cst_8 {dimension_numbers = #tpu.dot_dimension_numbers<[1], [0], [0], [1], [0, 0, 1, 1], [], []>} : vector<8x128xf32>, vector<128x128xf32>, vector<8x128xf32> -> vector<8x128xf32>
    %c0_9 = arith.constant 0 : index
    %c0_10 = arith.constant 0 : index
    %10 = vector.load %arg5[%c0_9, %c0_10] : memref<1x128xf32, #tpu.memory_space<vmem>>, vector<1x128xf32>
    %11 = vector.broadcast %10 : vector<1x128xf32> to vector<8x128xf32>
    %12 = arith.addf %9, %11 : vector<8x128xf32>
    %cst_11 = arith.constant dense<0xFF800000> : vector<8xf32>
    %13 = vector.multi_reduction <maximumf>, %12, %cst_11 [1] : vector<8x128xf32> to vector<8xf32>
    %14 = vector.shape_cast %13 : vector<8xf32> to vector<8x1xf32>
    %15 = vector.broadcast %14 : vector<8x1xf32> to vector<8x128xf32>
    %16 = arith.subf %12, %15 : vector<8x128xf32>
    %17 = math.exp %16 : vector<8x128xf32>
    %cst_12 = arith.constant dense<0.000000e+00> : vector<8xf32>
    %18 = vector.multi_reduction <add>, %17, %cst_12 [1] : vector<8x128xf32> to vector<8xf32>
    %19 = vector.shape_cast %18 : vector<8xf32> to vector<8x1xf32>
    %20 = math.log %19 : vector<8x1xf32>
    %21 = vector.broadcast %20 : vector<8x1xf32> to vector<8x128xf32>
    %22 = arith.subf %16, %21 : vector<8x128xf32>
    %23 = vector.extract_strided_slice %22 {offsets = [0, 0], sizes = [8, 16], strides = [1, 1]} : vector<8x128xf32> to vector<8x16xf32>
    %c0_13 = arith.constant 0 : index
    %c0_14 = arith.constant 0 : index
    %24 = vector.load %arg6[%c0_13, %c0_14] : memref<8x16xf32, #tpu.memory_space<vmem>>, vector<8x16xf32>
    tpu.vector_store %arg6[%c0_13, %c0_14], %23 {strides = array<i32>} : memref<8x16xf32, #tpu.memory_space<vmem>>, vector<8x16xf32>,
    return
  }
  func.func @transform_0(%arg0: i32) -> (i32, i32) {
    %c0_i32 = arith.constant 0 : i32
    %c0_i32_0 = arith.constant 0 : i32
    return %arg0, %c0_i32 : i32, i32
  }
  func.func @transform_1(%arg0: i32) -> (i32, i32) {
    %c0_i32 = arith.constant 0 : i32
    %c0_i32_0 = arith.constant 0 : i32
    %c0_i32_1 = arith.constant 0 : i32
    return %c0_i32, %c0_i32_0 : i32, i32
  }
  func.func @transform_2(%arg0: i32) -> (i32, i32) {
    %c0_i32 = arith.constant 0 : i32
    %c0_i32_0 = arith.constant 0 : i32
    %c0_i32_1 = arith.constant 0 : i32
    return %c0_i32, %c0_i32_0 : i32, i32
  }
  func.func @transform_3(%arg0: i32) -> (i32, i32) {
    %c0_i32 = arith.constant 0 : i32
    %c0_i32_0 = arith.constant 0 : i32
    %c0_i32_1 = arith.constant 0 : i32
    return %c0_i32, %c0_i32_0 : i32, i32
  }
  func.func @transform_4(%arg0: i32) -> (i32, i32) {
    %c0_i32 = arith.constant 0 : i32
    %c0_i32_0 = arith.constant 0 : i32
    %c0_i32_1 = arith.constant 0 : i32
    return %c0_i32, %c0_i32_0 : i32, i32
  }
  func.func @transform_5(%arg0: i32) -> (i32, i32) {
    %c0_i32 = arith.constant 0 : i32
    %c0_i32_0 = arith.constant 0 : i32
    return %arg0, %c0_i32 : i32, i32
  }
}

</mosaic_0001>

<llo_original>
// kernel: tpu_custom_call.1
$region0: #{tpu_custom_call.1}
  #allocation0 [shape = 'u32[]', space=smem, size = 0x4, offset = 0x4, fixed_abs, tag = 'smem constant byte address 0x4 - core index']
  #allocation1 [shape = 'u32[144,128]{1,0:T(1,128)}', space=vmem, size = 0x12000, scoped, tag = 'internal scratch']
  %s0 = inlined_call_operand.hbm [shape: f32[8,32], index: 0, kind: input, shape index: {}]
  %s1 = inlined_call_operand.hbm [shape: f32[32,128], index: 1, kind: input, shape index: {}]
  %s2 = inlined_call_operand.vmem [shape: f32[1,128], index: 2, kind: input, shape index: {}]
  %s3 = inlined_call_operand.hbm [shape: f32[128,128], index: 3, kind: input, shape index: {}]
  %s4 = inlined_call_operand.vmem [shape: f32[1,128], index: 4, kind: input, shape index: {}]
  %s5 = inlined_call_operand.hbm [shape: f32[8,16], index: 5, kind: output, shape index: {}]
  %s6 = sld [smem:[#allocation0]]
  $region42: #{tpu_custom_call.1} parent=0
    _
  %s8 = ssub.s32 1, %s6
  %s9 = scalar_select 0, %s8, %s6
  $region1: #{tpu_custom_call.1} parent=0
    #allocation2 [shape = 'u8[4096]{0}', space=vmem, size = 0x1000, scoped, tag = 'input window, operand 0, single buffered']
    #allocation3 [shape = 's32[1]{0}', space=sflag, size = 0x4, scoped, tag = 'scoped memory for tpu_custom_call.1']
    #allocation4 [shape = 's32[1]{0}', space=sflag, size = 0x4, scoped, tag = 'scoped memory for tpu_custom_call.1']
    #allocation5 [shape = 'u8[16384]{0}', space=vmem, size = 0x4000, scoped, tag = 'input window, operand 1, single buffered']
    #allocation6 [shape = 's32[1]{0}', space=sflag, size = 0x4, scoped, tag = 'scoped memory for tpu_custom_call.1']
    #allocation7 [shape = 'u8[65536]{0}', space=vmem, size = 0x10000, scoped, tag = 'input window, operand 3, single buffered']
    #allocation8 [shape = 'u8[4096]{0}', space=vmem, size = 0x1000, scoped, tag = 'output window, operand 0, single buffered']
    %10 = vsyncpa [#allocation3], 0
    %11 = vsyncpa [#allocation6], 0
    %12 = vsyncpa [#allocation4], 0
    // Predicated region
    $region2: #{tpu_custom_call.1} parent=1 // pred_check
      _
    $region3: #{tpu_custom_call.1} parent=1 // pred_check_branch
      %14 = sbr.rel (0) target = $region5
    $region4: #{tpu_custom_call.1} parent=1 // pred_region
      %s16 = ssub.s32 128, 128
      %17 = vsyncadd [#allocation3], %s16
      %s19 = sshll.u32 [#allocation2], 4
      %s20 = int_to_ptr.vmem [resolvable:$true] %s19
      %22 = dma.hbm_to_vmem [thread:$0]  %s0, 128, %s20, [#allocation3]
    $region5: #{tpu_custom_call.1} parent=1 // pred_fallthru
      _
    // Predicated region
    $region6: #{tpu_custom_call.1} parent=1 // pred_check
      _
    $region7: #{tpu_custom_call.1} parent=1 // pred_check_branch
      %24 = sbr.rel (0) target = $region9
    $region8: #{tpu_custom_call.1} parent=1 // pred_region
      %s26 = ssub.s32 512, 512
      %27 = vsyncadd [#allocation6], %s26
      %s28 = sshll.u32 [#allocation5], 4
      %s29 = int_to_ptr.vmem [resolvable:$true] %s28
      %34 = dma.hbm_to_vmem [thread:$0]  %s1, 512, %s29, [#allocation6], 128, 128, 8
    $region9: #{tpu_custom_call.1} parent=1 // pred_fallthru
      _
    // Predicated region
    $region10: #{tpu_custom_call.1} parent=1 // pred_check
      _
    $region11: #{tpu_custom_call.1} parent=1 // pred_check_branch
      %36 = sbr.rel (0) target = $region13
    $region12: #{tpu_custom_call.1} parent=1 // pred_region
      _
    $region13: #{tpu_custom_call.1} parent=1 // pred_fallthru
      _
    // Predicated region
    $region14: #{tpu_custom_call.1} parent=1 // pred_check
      _
    $region15: #{tpu_custom_call.1} parent=1 // pred_check_branch
      %38 = sbr.rel (0) target = $region17
    $region16: #{tpu_custom_call.1} parent=1 // pred_region
      %s40 = ssub.s32 2048, 2048
      %41 = vsyncadd [#allocation6], %s40
      %s42 = sshll.u32 [#allocation7], 4
      %s43 = int_to_ptr.vmem [resolvable:$true] %s42
      %48 = dma.hbm_to_vmem [thread:$0]  %s3, 2048, %s43, [#allocation6], 128, 128, 8
    $region17: #{tpu_custom_call.1} parent=1 // pred_fallthru
      _
    // Predicated region
    $region18: #{tpu_custom_call.1} parent=1 // pred_check
      _
    $region19: #{tpu_custom_call.1} parent=1 // pred_check_branch
      %50 = sbr.rel (0) target = $region21
    $region20: #{tpu_custom_call.1} parent=1 // pred_region
      _
    $region21: #{tpu_custom_call.1} parent=1 // pred_fallthru
      _
    // Predicated region
    $region22: #{tpu_custom_call.1} parent=1 // pred_check
      _
    $region23: #{tpu_custom_call.1} parent=1 // pred_check_branch
      %52 = sbr.rel (0) target = $region25
    $region24: #{tpu_custom_call.1} parent=1 // pred_region
      %53 = dma.done [#allocation3], 128
    $region25: #{tpu_custom_call.1} parent=1 // pred_fallthru
      _
    // Predicated region
    $region26: #{tpu_custom_call.1} parent=1 // pred_check
      _
    $region27: #{tpu_custom_call.1} parent=1 // pred_check_branch
      %55 = sbr.rel (0) target = $region29
    $region28: #{tpu_custom_call.1} parent=1 // pred_region
      %56 = dma.done [#allocation6], 512
    $region29: #{tpu_custom_call.1} parent=1 // pred_fallthru
      _
    // Predicated region
    $region30: #{tpu_custom_call.1} parent=1 // pred_check
      _
    $region31: #{tpu_custom_call.1} parent=1 // pred_check_branch
      %58 = sbr.rel (0) target = $region33
    $region32: #{tpu_custom_call.1} parent=1 // pred_region
      %59 = dma.done [#allocation6], 2048
    $region33: #{tpu_custom_call.1} parent=1 // pred_fallthru
      _
    %v60 = vld [vmem:[#allocation2] sm:$0xff]
    %v61 = vld [vmem:[#allocation5] sm:$0xff]
    %v62 = vld [vmem:[#allocation5 + $0x8] sm:$0xff]
    %v63 = vld [vmem:[#allocation5 + $0x10] sm:$0xff]
    %v64 = vld [vmem:[#allocation5 + $0x18] sm:$0xff]
    %v65 = vld [vmem:[%s2] sm:$0x1]
    %v67 = vlaneseq
    %v68 = vshrl.u32 %v67, 7
    %v69 = vsub.s32 0, %v68
    %v70 = vrot.slane %v65, %v69
    %vm72 = vcmask 261120
    %v74 = vsel %vm72, %v60, 0
    %76 = vmatprep.subr.mxu0 0.0
    %77 = vmatpush1.msra.mxu0 %v61
    %78 = vmatprep.subr.mxu0 0.0
    %79 = vmatpush1.msra.mxu0 %v62
    %80 = vmatprep.subr.mxu0 0.0
    %81 = vmatpush1.msra.mxu0 %v63
    %82 = vmatprep.subr.mxu0 0.0
    %83 = vmatpush1.msra.mxu0 %v64
    %84 = vmatprep.subr.mxu0 0.0
    %85 = vmatpush1.msra.mxu0 0.0
    %86 = vmatprep.subr.mxu0 0.0
    %87 = vmatpush1.msra.mxu0 0.0
    %88 = vmatprep.subr.mxu0 0.0
    %89 = vmatpush1.msra.mxu0 0.0
    %90 = vmatprep.subr.mxu0 0.0
    %91 = vmatpush1.msra.mxu0 0.0
    %92 = vmatprep.subr.mxu0 0.0
    %93 = vmatpush1.msra.mxu0 0.0
    %94 = vmatprep.subr.mxu0 0.0
    %95 = vmatpush1.msra.mxu0 0.0
    %96 = vmatprep.subr.mxu0 0.0
    %97 = vmatpush1.msra.mxu0 0.0
    %98 = vmatprep.subr.mxu0 0.0
    %99 = vmatpush1.msra.mxu0 0.0
    %100 = vmatprep.subr.mxu0 0.0
    %101 = vmatpush1.msra.mxu0 0.0
    %102 = vmatprep.subr.mxu0 0.0
    %103 = vmatpush1.msra.mxu0 0.0
    %104 = vmatprep.subr.mxu0 0.0
    %105 = vmatpush1.msra.mxu0 0.0
    %106 = vmatprep.subr.mxu0 0.0
    %107 = vmatpush1.msra.mxu0 0.0
    %108 = vmatprep.subr.mxu0 0.0
    %109 = vmatpush1.msra.mxu0 0.0
    %110 = vmatprep.subr.mxu0 0.0
    %111 = vmatpush1.msra.mxu0 0.0
    %112 = vmatprep.subr.mxu0 0.0
    %113 = vmatpush1.msra.mxu0 0.0
    %114 = vmatprep.subr.mxu0 0.0
    %115 = vmatpush1.msra.mxu0 0.0
    %116 = vmatprep.subr.mxu0 0.0
    %117 = vmatpush1.msra.mxu0 0.0
    %118 = vmatprep.subr.mxu0 0.0
    %119 = vmatpush1.msra.mxu0 0.0
    %120 = vmatprep.subr.mxu0 0.0
    %121 = vmatpush1.msra.mxu0 0.0
    %122 = vmatprep.subr.mxu0 0.0
    %123 = vmatpush1.msra.mxu0 0.0
    %124 = vmatprep.subr.mxu0 0.0
    %125 = vmatpush1.msra.mxu0 0.0
    %126 = vmatprep.subr.mxu0 0.0
    %127 = vmatpush1.msra.mxu0 0.0
    %128 = vmatprep.subr.mxu0 0.0
    %129 = vmatpush1.msra.mxu0 0.0
    %130 = vmatprep.subr.mxu0 0.0
    %131 = vmatpush1.msra.mxu0 0.0
    %132 = vmatprep.subr.mxu0 0.0
    %133 = vmatpush1.msra.mxu0 0.0
    %134 = vmatprep.subr.mxu0 0.0
    %135 = vmatpush1.msra.mxu0 0.0
    %136 = vmatprep.subr.mxu0 0.0
    %137 = vmatpush1.msra.mxu0 0.0
    %138 = vmatprep.subr.mxu0 0.0
    %139 = vmatpush1.msra.mxu0 0.0
    %140 = vmatprep.mubr.f32.mxu0 0.0
    %141 = vmatmul.mubr.f32.gmra.mrb[0].mxu0 %v74
    %v142 = vpop.f32.mrb[0].mxu0
    %v143 = vadd.f32 %v70, %v142
    %v144 = vpop.f32.mrb[0].mxu0
    %145 = vdwg.mxu0
    %v146 = vmax.f32 %v143, 0.0
    %v147 = vld [vmem:[#allocation7] sm:$0xff]
    %v148 = vld [vmem:[#allocation7 + $0x8] sm:$0xff]
    %v149 = vld [vmem:[#allocation7 + $0x10] sm:$0xff]
    %v150 = vld [vmem:[#allocation7 + $0x18] sm:$0xff]
    %v151 = vld [vmem:[#allocation7 + $0x20] sm:$0xff]
    %v152 = vld [vmem:[#allocation7 + $0x28] sm:$0xff]
    %v153 = vld [vmem:[#allocation7 + $0x30] sm:$0xff]
    %v154 = vld [vmem:[#allocation7 + $0x38] sm:$0xff]
    %v155 = vld [vmem:[#allocation7 + $0x40] sm:$0xff]
    %v156 = vld [vmem:[#allocation7 + $0x48] sm:$0xff]
    %v157 = vld [vmem:[#allocation7 + $0x50] sm:$0xff]
    %v158 = vld [vmem:[#allocation7 + $0x58] sm:$0xff]
    %v159 = vld [vmem:[#allocation7 + $0x60] sm:$0xff]
    %v160 = vld [vmem:[#allocation7 + $0x68] sm:$0xff]
    %v161 = vld [vmem:[#allocation7 + $0x70] sm:$0xff]
    %v162 = vld [vmem:[#allocation7 + $0x78] sm:$0xff]
    %v163 = vld [vmem:[%s4] sm:$0x1]
    %v165 = vlaneseq
    %v166 = vshrl.u32 %v165, 7
    %v167 = vsub.s32 0, %v166
    %v168 = vrot.slane %v163, %v167
    %170 = vmatprep.subr.mxu0 0.0
    %171 = vmatpush1.msra.mxu0 %v147
    %172 = vmatprep.subr.mxu0 0.0
    %173 = vmatpush1.msra.mxu0 %v148
    %174 = vmatprep.subr.mxu0 0.0
    %175 = vmatpush1.msra.mxu0 %v149
    %176 = vmatprep.subr.mxu0 0.0
    %177 = vmatpush1.msra.mxu0 %v150
    %178 = vmatprep.subr.mxu0 0.0
    %179 = vmatpush1.msra.mxu0 %v151
    %180 = vmatprep.subr.mxu0 0.0
    %181 = vmatpush1.msra.mxu0 %v152
    %182 = vmatprep.subr.mxu0 0.0
    %183 = vmatpush1.msra.mxu0 %v153
    %184 = vmatprep.subr.mxu0 0.0
    %185 = vmatpush1.msra.mxu0 %v154
    %186 = vmatprep.subr.mxu0 0.0
    %187 = vmatpush1.msra.mxu0 %v155
    %188 = vmatprep.subr.mxu0 0.0
    %189 = vmatpush1.msra.mxu0 %v156
    %190 = vmatprep.subr.mxu0 0.0
    %191 = vmatpush1.msra.mxu0 %v157
    %192 = vmatprep.subr.mxu0 0.0
    %193 = vmatpush1.msra.mxu0 %v158
    %194 = vmatprep.subr.mxu0 0.0
    %195 = vmatpush1.msra.mxu0 %v159
    %196 = vmatprep.subr.mxu0 0.0
    %197 = vmatpush1.msra.mxu0 %v160
    %198 = vmatprep.subr.mxu0 0.0
    %199 = vmatpush1.msra.mxu0 %v161
    %200 = vmatprep.subr.mxu0 0.0
    %201 = vmatpush1.msra.mxu0 %v162
    %202 = vmatprep.subr.mxu0 0.0
    %203 = vmatpush1.msra.mxu0 0.0
    %204 = vmatprep.subr.mxu0 0.0
    %205 = vmatpush1.msra.mxu0 0.0
    %206 = vmatprep.subr.mxu0 0.0
    %207 = vmatpush1.msra.mxu0 0.0
    %208 = vmatprep.subr.mxu0 0.0
    %209 = vmatpush1.msra.mxu0 0.0
    %210 = vmatprep.subr.mxu0 0.0
    %211 = vmatpush1.msra.mxu0 0.0
    %212 = vmatprep.subr.mxu0 0.0
    %213 = vmatpush1.msra.mxu0 0.0
    %214 = vmatprep.subr.mxu0 0.0
    %215 = vmatpush1.msra.mxu0 0.0
    %216 = vmatprep.subr.mxu0 0.0
    %217 = vmatpush1.msra.mxu0 0.0
    %218 = vmatprep.subr.mxu0 0.0
    %219 = vmatpush1.msra.mxu0 0.0
    %220 = vmatprep.subr.mxu0 0.0
    %221 = vmatpush1.msra.mxu0 0.0
    %222 = vmatprep.subr.mxu0 0.0
    %223 = vmatpush1.msra.mxu0 0.0
    %224 = vmatprep.subr.mxu0 0.0
    %225 = vmatpush1.msra.mxu0 0.0
    %226 = vmatprep.subr.mxu0 0.0
    %227 = vmatpush1.msra.mxu0 0.0
    %228 = vmatprep.subr.mxu0 0.0
    %229 = vmatpush1.msra.mxu0 0.0
    %230 = vmatprep.subr.mxu0 0.0
    %231 = vmatpush1.msra.mxu0 0.0
    %232 = vmatprep.subr.mxu0 0.0
    %233 = vmatpush1.msra.mxu0 0.0
    %234 = vmatprep.mubr.f32.mxu0 0.0
    %235 = vmatmul.mubr.f32.gmra.mrb[0].mxu0 %v146
    %v236 = vpop.f32.mrb[0].mxu0
    %v237 = vadd.f32 %v168, %v236
    %v238 = vpop.f32.mrb[0].mxu0
    %239 = vdwg.mxu0
    %240 = vmax.xlane.f32.xlu0 %v237
    %v241 = vpop.xlane.xlu0 %240
    %v242 = vsub.f32 %v237, %v241
    %v243 = vmul.f32 %v242, 1.442695
    %v244 = vpow.pop %v243
    %245 = vadd.xlane.f32.xlu0 %v244
    %v246 = vpop.xlane.xlu0 %245
    %v247 = vlog2.pop %v246
    %v248 = vmul.f32 %v247, 0.6931472
    %v249 = vsub.f32 %v242, %v248
    %vm250 = vcmask 130048
    %251 = vst.msk [vmem:[#allocation8] sm:$0xff] %vm250, %v249
    // Predicated region
    $region34: #{tpu_custom_call.1} parent=1 // pred_check
      _
    $region35: #{tpu_custom_call.1} parent=1 // pred_check_branch
      %253 = sbr.rel (0) target = $region37
    $region36: #{tpu_custom_call.1} parent=1 // pred_region
      %s255 = ssub.s32 128, 128
      %256 = vsyncadd [#allocation4], %s255
      %s258 = sshll.u32 [#allocation8], 4
      %s259 = int_to_ptr.vmem [resolvable:$true] %s258
      %261 = dma.vmem_to_hbm [thread:$0]  %s259, 128, %s5, [#allocation4]
    $region37: #{tpu_custom_call.1} parent=1 // pred_fallthru
      _
    // Predicated region
    $region38: #{tpu_custom_call.1} parent=1 // pred_check
      _
    $region39: #{tpu_custom_call.1} parent=1 // pred_check_branch
      %263 = sbr.rel (0) target = $region41
    $region40: #{tpu_custom_call.1} parent=1 // pred_region
      %264 = dma.done [#allocation4], 128
    $region41: #{tpu_custom_call.1} parent=1 // pred_fallthru
      _
    %265 = vsyncpa [#allocation3], 1
    %266 = vsyncpa [#allocation6], 1
    %267 = vsyncpa [#allocation4], 1

</llo_original>
